<compile_context>
chip_gen: v7x
topology: tpu7x:2x2x1
jax: 0.10.0
libtpu: 0.0.40
codegen_flags: <defaults>
</compile_context>

<pallas_src>
import functools

import jax
import jax.numpy as jnp
from jax import lax
from jax.experimental import pallas as pl
from jax.experimental.pallas import tpu as pltpu


def _cdiv(a, b):
    return -(-a // b)


def _round_up(x, m):
    return ((x + m - 1) // m) * m


# -----------------------------------------------------------------------------
# Kernel 1: class prototypes (MXU matmul, K-tiled) + prototype squared norms.
# -----------------------------------------------------------------------------
def _proto_kernel(support_ref, protos_ref, psq_ref, acc_ref, *, nshot, n_support):
    """support_ref: (TK, D)        label-sorted (zero-padded) support chunk
       protos_ref:  (nway_sub, D)  class prototypes (zero rows for pad classes)
       psq_ref:     (nway_sub, 1)  prototype squared norms
       acc_ref:     (nway_sub, D)  f32 accumulator scratch (resident)
    """
    k = pl.program_id(0)

    @pl.when(k == 0)
    def _init():
        acc_ref[...] = jnp.zeros_like(acc_ref)

    nway_sub, _ = acc_ref.shape
    tk = support_ref.shape[0]
    # 0/1 class-membership weights generated in-kernel (no HBM wmat input):
    # row c selects sorted support columns [c*nshot, (c+1)*nshot).  Columns
    # >= n_support (zero padding) get weight 0.  No vector integer division.
    row = lax.broadcasted_iota(jnp.int32, (nway_sub, tk), 0)
    col = lax.broadcasted_iota(jnp.int32, (nway_sub, tk), 1) + k * tk
    sel = (col >= row * nshot) & (col < (row + 1) * nshot) & (col < n_support)
    w = jnp.where(sel, 1.0, 0.0).astype(support_ref.dtype)
    # native-dtype MXU matmul with f32 accumulation (no pre-cast of support)
    acc_ref[...] += jnp.dot(w, support_ref[...],
                            preferred_element_type=jnp.float32)

    @pl.when(k == pl.num_programs(0) - 1)
    def _finalize():
        protos = (acc_ref[...] * (1.0 / nshot)).astype(protos_ref.dtype)
        protos_ref[...] = protos
        # squared norms from the *stored* prototypes -> consistent with kernel 2
        pf = protos.astype(jnp.float32)
        psq_ref[...] = jnp.sum(pf * pf, axis=-1, keepdims=True)


# -----------------------------------------------------------------------------
# Kernel 2: streamed pairwise squared-L2 distances -> transposed scores.
# -----------------------------------------------------------------------------
def _dist_kernel(protos_ref, psq_ref, query_ref, out_ref):
    """protos_ref: (nway_sub, D)   resident across all Q tiles (constant block)
       psq_ref:    (nway_sub, 1)   resident prototype squared norms
       query_ref:  (TQ, D)         current (possibly ragged) query tile
       out_ref:    (nway_sub, TQ)  scores^T = -squared-L2 distances, transposed
    """
    q = query_ref[...]                                          # (TQ, D)
    # MXU: protos (nway_sub, D) x q (TQ, D)^T -> (nway_sub, TQ), f32 accumulate
    pq = lax.dot_general(
        protos_ref[...], q,
        dimension_numbers=(((1,), (1,)), ((), ())),
        preferred_element_type=jnp.float32,
    )
    qf = q.astype(jnp.float32)
    # ||q||^2 as a lane-dense (1, TQ) row via a cheap MXU contraction with a
    # ones row; avoids a (TQ,1)->(1,TQ) cross-lane relayout in the epilogue.
    qsq = lax.dot_general(
        jnp.ones((1, qf.shape[1]), jnp.float32), qf * qf,
        dimension_numbers=(((1,), (1,)), ((), ())),
        preferred_element_type=jnp.float32,
    )                                                           # (1, TQ)
    # scores^T = -(||q||^2 - 2 q.p + ||p||^2); clamp only suppresses FP noise.
    out_ref[...] = jnp.minimum(2.0 * pq - psq_ref[...] - qsq, 0.0)


# -----------------------------------------------------------------------------
# Tile-size policies (account for the VMEM the pipeline actually allocates).
# -----------------------------------------------------------------------------
def _choose_tk(n_support, d, itemsize):
    """Support-row chunk for kernel 1's reduction axis.  Small episodes use a
    single block; large ones are tiled so the double-buffered support block
    stays <= ~8 MiB (safe inside v7x's 64 MiB physical / 32 MiB scoped VMEM)."""
    n8 = _round_up(n_support, 8)
    budget = 8 * 1024 * 1024
    tk = (budget // max(2 * d * itemsize, 1)) // 8 * 8
    return int(max(8, min(n8, tk)))


def _choose_tq(q_rows, d, q_itemsize, nway_sub, p_itemsize):
    """Query tile for kernel 2 (lane dim of the transposed output).

    Budgets what the pipeline allocates: 2x (tq, d) query buffers + 2x
    (nway_sub, tq) f32 output buffers, on top of the resident protos/psq,
    leaving headroom inside the explicit 32 MiB vmem limit for in-kernel f32
    intermediates.  tq is a multiple of 128 (lane-dense output stores) and the
    grid is kept >= 2 steps when Q > 128 so both v7x TensorCores get work."""
    if q_rows <= 128:
        return int(q_rows)                      # single full-dim tile
    budget = 16 * 1024 * 1024
    resident = 2 * nway_sub * (d * p_itemsize + 4)
    avail = max(budget - resident, 2 * 1024 * 1024)
    per_q = 2 * d * q_itemsize + 2 * nway_sub * 4
    tq = (avail // per_q) // 128 * 128
    tq = max(128, min(1024, tq))
    tq = min(tq, _round_up(_cdiv(q_rows, 2), 128))   # >= 2 grid steps
    return int(tq)


# -----------------------------------------------------------------------------
# Wrapper.
# -----------------------------------------------------------------------------
@functools.partial(jax.jit, static_argnames=("nway",))
def protonet_forward(support_embs, support_labels, query_embs, nway):
    """ProtoNet.forward.  `nway` must be static (number of unique labels).

    Assumes support_labels contain exactly `nway` distinct labels with an
    equal number of shots per class (same assumption as the PyTorch module).
    """
    # TODO(synk): only the default distance='l2' path is implemented; the
    # pairwise_distances helper for other metrics is not part of the spec.
    n_support, d = support_embs.shape
    if n_support % nway != 0:
        raise ValueError("n_support must be divisible by nway")
    nshot = n_support // nway
    q_rows = query_embs.shape[0]
    nway_sub = _round_up(nway, 8)                 # sublane-aligned class axis

    # glue: group the support set by (sorted) class label
    order = jnp.argsort(support_labels)
    support_sorted = support_embs[order]          # (n_support, D)

    # ---- kernel 1: prototypes + squared norms (computed exactly once) -------
    tk = _choose_tk(n_support, d, support_embs.dtype.itemsize)
    n_sup_pad = _round_up(n_support, tk)
    if n_sup_pad != n_support:
        # tiny zero pad (< tk rows) so every K block reads real, finite data;
        # padded columns get exactly zero weight in-kernel.
        support_sorted = jnp.pad(
            support_sorted, ((0, n_sup_pad - n_support), (0, 0)))

    protos, psq = pl.pallas_call(
        functools.partial(_proto_kernel, nshot=nshot, n_support=n_support),
        out_shape=(
            jax.ShapeDtypeStruct((nway_sub, d), support_embs.dtype),
            jax.ShapeDtypeStruct((nway_sub, 1), jnp.float32),
        ),
        grid=(n_sup_pad // tk,),
        in_specs=[pl.BlockSpec((tk, d), lambda k: (k, 0))],
        out_specs=(
            pl.BlockSpec((nway_sub, d), lambda k: (0, 0)),
            pl.BlockSpec((nway_sub, 1), lambda k: (0, 0)),
        ),
        scratch_shapes=[pltpu.VMEM((nway_sub, d), jnp.float32)],
        compiler_params=pltpu.CompilerParams(
            dimension_semantics=("arbitrary",),          # reduction axis
            vmem_limit_bytes=32 * 1024 * 1024,
        ),
    )(support_sorted)

    # ---- kernel 2: streamed, pipelined distance computation ------------------
    tq = _choose_tq(q_rows, d, query_embs.dtype.itemsize, nway_sub,
                    support_embs.dtype.itemsize)
    grid_q = pl.cdiv(q_rows, tq)                 # no jnp.pad of the query set

    scores_t = pl.pallas_call(
        _dist_kernel,
        out_shape=jax.ShapeDtypeStruct((nway_sub, q_rows), jnp.float32),
        grid=(grid_q,),
        in_specs=[
            # resident prototypes / norms: constant block index => fetched once
            pl.BlockSpec((nway_sub, d), lambda i: (0, 0)),
            pl.BlockSpec((nway_sub, 1), lambda i: (0, 0)),
            # streamed query tile (ragged last tile masked by the pipeline)
            pl.BlockSpec((tq, d), lambda i: (i, 0)),
        ],
        out_specs=pl.BlockSpec((nway_sub, tq), lambda i: (0, i)),
        compiler_params=pltpu.CompilerParams(
            dimension_semantics=("parallel",),
            vmem_limit_bytes=32 * 1024 * 1024,
        ),
    )(protos, psq, query_embs)

    # tiny wrapper-side slice + transpose of the (nway, Q) result
    return scores_t[:nway, :].T


def _reference_forward(support_embs, support_labels, query_embs, nway):
    """Pure-JAX reference mirroring the PyTorch module."""
    n_support, d = support_embs.shape
    nshot = n_support // nway
    order = jnp.argsort(support_labels)
    protos = support_embs[order].reshape(nway, nshot, d).mean(axis=1)
    diff = query_embs[:, None, :] - protos[None, :, :]
    dist = jnp.sum(diff * diff, axis=-1)
    return -dist


if __name__ == "__main__":
    key = jax.random.PRNGKey(0)
    k_sup, k_qry = jax.random.split(key)

    # small few-shot episode: 4-way, 2-shot, feature_dim = 32
    nway, nshot, D = 4, 2, 32
    n_support = nway * nshot
    n_query = nway * nshot

    support_embs = jax.random.normal(k_sup, (n_support, D), dtype=jnp.float32)
    query_embs = jax.random.normal(k_qry, (n_query, D), dtype=jnp.float32)
    # deterministic shuffled labels covering all nway classes, nshot each
    support_labels = jnp.array([2, 0, 1, 3, 0, 1, 2, 3], dtype=jnp.int32)

    scores = protonet_forward(support_embs, support_labels, query_embs, nway)
    scores = jax.block_until_ready(scores)

    ref = _reference_forward(support_embs, support_labels, query_embs, nway)
    assert scores.shape == (n_query, nway)
    max_err = jnp.max(jnp.abs(scores - ref))
    assert jnp.allclose(scores, ref, rtol=1e-4, atol=1e-4), (
        f"mismatch: max abs err = {max_err}"
    )

    print("KERNEL_OK")
</pallas_src>

<mosaic_0001>
module attributes {stable_mosaic.version = 11 : i64} {
  func.func @_proto_kernel(%arg0: i32, %arg1: memref<8x32xf32, #tpu.memory_space<vmem>>, %arg2: memref<8x32xf32, #tpu.memory_space<vmem>>, %arg3: memref<8x1xf32, #tpu.memory_space<vmem>>, %arg4: memref<8x32xf32, #tpu.memory_space<vmem>>) attributes {dimension_semantics = [#tpu.dimension_semantics<arbitrary>], iteration_bounds = array<i64: 1>, scalar_prefetch = 0 : i64, scratch_operands = 1 : i64, tpu.core_type = #tpu.core_type<tc>, window_params = [{transform_indices = @transform_0, window_bounds = array<i64: 8, 32>}, {pipeline_mode = #tpu.pipeline_mode<synchronous>, transform_indices = @transform_1, window_bounds = array<i64: 8, 32>}, {pipeline_mode = #tpu.pipeline_mode<synchronous>, transform_indices = @transform_2, window_bounds = array<i64: 8, 1>}]} {
    %c0_i32 = arith.constant 0 : i32
    %0 = arith.cmpi eq, %arg0, %c0_i32 : i32
    %1 = arith.extui %0 : i1 to i32
    %c0_i32_0 = arith.constant 0 : i32
    %2 = arith.cmpi ne, %1, %c0_i32_0 : i32
    scf.if %2 {
      %cst_12 = arith.constant 0.000000e+00 : f32
      %31 = vector.broadcast %cst_12 : f32 to vector<8x32xf32>
      %c0_13 = arith.constant 0 : index
      %c0_14 = arith.constant 0 : index
      %32 = vector.load %arg4[%c0_13, %c0_14] : memref<8x32xf32, #tpu.memory_space<vmem>>, vector<8x32xf32>
      tpu.vector_store %arg4[%c0_13, %c0_14], %31 {strides = array<i32>} : memref<8x32xf32, #tpu.memory_space<vmem>>, vector<8x32xf32>,
    } else {
    }
    %3 = tpu.iota {dimensions = array<i32: 0>} : vector<8x8xi32>
    %4 = tpu.iota {dimensions = array<i32: 1>} : vector<8x8xi32>
    %c8_i32 = arith.constant 8 : i32
    %5 = arith.muli %arg0, %c8_i32 : i32
    %6 = vector.broadcast %5 : i32 to vector<8x8xi32>
    %7 = arith.addi %4, %6 : vector<8x8xi32>
    %c2_i32 = arith.constant 2 : i32
    %8 = vector.broadcast %c2_i32 : i32 to vector<8x8xi32>
    %9 = arith.muli %3, %8 : vector<8x8xi32>
    %10 = arith.cmpi sge, %7, %9 : vector<8x8xi32>
    %c1_i32 = arith.constant 1 : i32
    %11 = vector.broadcast %c1_i32 : i32 to vector<8x8xi32>
    %12 = arith.addi %3, %11 : vector<8x8xi32>
    %c2_i32_1 = arith.constant 2 : i32
    %13 = vector.broadcast %c2_i32_1 : i32 to vector<8x8xi32>
    %14 = arith.muli %12, %13 : vector<8x8xi32>
    %15 = arith.cmpi slt, %7, %14 : vector<8x8xi32>
    %16 = arith.andi %10, %15 : vector<8x8xi1>
    %c8_i32_2 = arith.constant 8 : i32
    %17 = vector.broadcast %c8_i32_2 : i32 to vector<8x8xi32>
    %18 = arith.cmpi slt, %7, %17 : vector<8x8xi32>
    %19 = arith.andi %16, %18 : vector<8x8xi1>
    %cst = arith.constant 1.000000e+00 : f32
    %cst_3 = arith.constant 0.000000e+00 : f32
    %20 = vector.broadcast %cst : f32 to vector<8x8xf32>
    %21 = vector.broadcast %cst_3 : f32 to vector<8x8xf32>
    %22 = arith.select %19, %20, %21 : vector<8x8xi1>, vector<8x8xf32>
    %c0 = arith.constant 0 : index
    %c0_4 = arith.constant 0 : index
    %23 = vector.load %arg4[%c0, %c0_4] : memref<8x32xf32, #tpu.memory_space<vmem>>, vector<8x32xf32>
    %c0_5 = arith.constant 0 : index
    %c0_6 = arith.constant 0 : index
    %24 = vector.load %arg1[%c0_5, %c0_6] : memref<8x32xf32, #tpu.memory_space<vmem>>, vector<8x32xf32>
    %cst_7 = arith.constant dense<0.000000e+00> : vector<8x32xf32>
    %25 = tpu.matmul %22, %24, %cst_7 {dimension_numbers = #tpu.dot_dimension_numbers<[1], [0], [0], [1], [0, 0, 1, 1], [], []>} : vector<8x8xf32>, vector<8x32xf32>, vector<8x32xf32> -> vector<8x32xf32>
    %26 = arith.addf %23, %25 : vector<8x32xf32>
    %c0_8 = arith.constant 0 : index
    %c0_9 = arith.constant 0 : index
    %27 = vector.load %arg4[%c0_8, %c0_9] : memref<8x32xf32, #tpu.memory_space<vmem>>, vector<8x32xf32>
    tpu.vector_store %arg4[%c0_8, %c0_9], %26 {strides = array<i32>} : memref<8x32xf32, #tpu.memory_space<vmem>>, vector<8x32xf32>,
    %c0_i32_10 = arith.constant 0 : i32
    %28 = arith.cmpi eq, %arg0, %c0_i32_10 : i32
    %29 = arith.extui %28 : i1 to i32
    %c0_i32_11 = arith.constant 0 : i32
    %30 = arith.cmpi ne, %29, %c0_i32_11 : i32
    scf.if %30 {
      %c0_12 = arith.constant 0 : index
      %c0_13 = arith.constant 0 : index
      %31 = vector.load %arg4[%c0_12, %c0_13] : memref<8x32xf32, #tpu.memory_space<vmem>>, vector<8x32xf32>
      %cst_14 = arith.constant 5.000000e-01 : f32
      %32 = vector.broadcast %cst_14 : f32 to vector<8x32xf32>
      %33 = arith.mulf %31, %32 : vector<8x32xf32>
      %c0_15 = arith.constant 0 : index
      %c0_16 = arith.constant 0 : index
      %34 = vector.load %arg2[%c0_15, %c0_16] : memref<8x32xf32, #tpu.memory_space<vmem>>, vector<8x32xf32>
      tpu.vector_store %arg2[%c0_15, %c0_16], %33 {strides = array<i32>} : memref<8x32xf32, #tpu.memory_space<vmem>>, vector<8x32xf32>,
      %35 = arith.mulf %33, %33 : vector<8x32xf32>
      %cst_17 = arith.constant dense<0.000000e+00> : vector<8xf32>
      %36 = vector.multi_reduction <add>, %35, %cst_17 [1] : vector<8x32xf32> to vector<8xf32>
      %37 = vector.shape_cast %36 : vector<8xf32> to vector<8x1xf32>
      %c0_18 = arith.constant 0 : index
      %c0_19 = arith.constant 0 : index
      %38 = vector.load %arg3[%c0_18, %c0_19] : memref<8x1xf32, #tpu.memory_space<vmem>>, vector<8x1xf32>
      tpu.vector_store %arg3[%c0_18, %c0_19], %37 {strides = array<i32>} : memref<8x1xf32, #tpu.memory_space<vmem>>, vector<8x1xf32>,
    } else {
    }
    return
  }
  func.func @transform_0(%arg0: i32) -> (i32, i32) {
    %c0_i32 = arith.constant 0 : i32
    %c0_i32_0 = arith.constant 0 : i32
    return %arg0, %c0_i32 : i32, i32
  }
  func.func @transform_1(%arg0: i32) -> (i32, i32) {
    %c0_i32 = arith.constant 0 : i32
    %c0_i32_0 = arith.constant 0 : i32
    %c0_i32_1 = arith.constant 0 : i32
    return %c0_i32, %c0_i32_0 : i32, i32
  }
  func.func @transform_2(%arg0: i32) -> (i32, i32) {
    %c0_i32 = arith.constant 0 : i32
    %c0_i32_0 = arith.constant 0 : i32
    %c0_i32_1 = arith.constant 0 : i32
    return %c0_i32, %c0_i32_0 : i32, i32
  }
}

module attributes {stable_mosaic.version = 11 : i64} {
  func.func @_dist_kernel(%arg0: i32, %arg1: memref<8x32xf32, #tpu.memory_space<vmem>>, %arg2: memref<8x1xf32, #tpu.memory_space<vmem>>, %arg3: memref<8x32xf32, #tpu.memory_space<vmem>>, %arg4: memref<8x8xf32, #tpu.memory_space<vmem>>) attributes {dimension_semantics = [#tpu.dimension_semantics<parallel>], iteration_bounds = array<i64: 1>, scalar_prefetch = 0 : i64, scratch_operands = 0 : i64, tpu.core_type = #tpu.core_type<tc>, window_params = [{pipeline_mode = #tpu.pipeline_mode<synchronous>, transform_indices = @transform_0, window_bounds = array<i64: 8, 32>}, {pipeline_mode = #tpu.pipeline_mode<synchronous>, transform_indices = @transform_1, window_bounds = array<i64: 8, 1>}, {transform_indices = @transform_2, window_bounds = array<i64: 8, 32>}, {transform_indices = @transform_3, window_bounds = array<i64: 8, 8>}]} {
    %c0 = arith.constant 0 : index
    %c0_0 = arith.constant 0 : index
    %0 = vector.load %arg3[%c0, %c0_0] : memref<8x32xf32, #tpu.memory_space<vmem>>, vector<8x32xf32>
    %c0_1 = arith.constant 0 : index
    %c0_2 = arith.constant 0 : index
    %1 = vector.load %arg1[%c0_1, %c0_2] : memref<8x32xf32, #tpu.memory_space<vmem>>, vector<8x32xf32>
    %cst = arith.constant dense<0.000000e+00> : vector<8x8xf32>
    %2 = tpu.matmul %1, %0, %cst {dimension_numbers = #tpu.dot_dimension_numbers<[1], [1], [0], [0], [0, 0, 1, 0], [], []>} : vector<8x32xf32>, vector<8x32xf32>, vector<8x8xf32> -> vector<8x8xf32>
    %cst_3 = arith.constant 1.000000e+00 : f32
    %3 = vector.broadcast %cst_3 : f32 to vector<1x32xf32>
    %4 = arith.mulf %0, %0 : vector<8x32xf32>
    %cst_4 = arith.constant dense<0.000000e+00> : vector<1x8xf32>
    %5 = tpu.matmul %3, %4, %cst_4 {dimension_numbers = #tpu.dot_dimension_numbers<[1], [1], [0], [0], [0, 0, 1, 0], [], []>} : vector<1x32xf32>, vector<8x32xf32>, vector<1x8xf32> -> vector<1x8xf32>
    %cst_5 = arith.constant 2.000000e+00 : f32
    %6 = vector.broadcast %cst_5 : f32 to vector<8x8xf32>
    %7 = arith.mulf %6, %2 : vector<8x8xf32>
    %c0_6 = arith.constant 0 : index
    %c0_7 = arith.constant 0 : index
    %8 = vector.load %arg2[%c0_6, %c0_7] : memref<8x1xf32, #tpu.memory_space<vmem>>, vector<8x1xf32>
    %9 = vector.broadcast %8 : vector<8x1xf32> to vector<8x8xf32>
    %10 = arith.subf %7, %9 : vector<8x8xf32>
    %11 = vector.broadcast %5 : vector<1x8xf32> to vector<8x8xf32>
    %12 = arith.subf %10, %11 : vector<8x8xf32>
    %cst_8 = arith.constant 0.000000e+00 : f32
    %13 = vector.broadcast %cst_8 : f32 to vector<8x8xf32>
    %14 = arith.minimumf %12, %13 : vector<8x8xf32>
    %c0_9 = arith.constant 0 : index
    %c0_10 = arith.constant 0 : index
    %15 = vector.load %arg4[%c0_9, %c0_10] : memref<8x8xf32, #tpu.memory_space<vmem>>, vector<8x8xf32>
    tpu.vector_store %arg4[%c0_9, %c0_10], %14 {strides = array<i32>} : memref<8x8xf32, #tpu.memory_space<vmem>>, vector<8x8xf32>,
    return
  }
  func.func @transform_0(%arg0: i32) -> (i32, i32) {
    %c0_i32 = arith.constant 0 : i32
    %c0_i32_0 = arith.constant 0 : i32
    %c0_i32_1 = arith.constant 0 : i32
    return %c0_i32, %c0_i32_0 : i32, i32
  }
  func.func @transform_1(%arg0: i32) -> (i32, i32) {
    %c0_i32 = arith.constant 0 : i32
    %c0_i32_0 = arith.constant 0 : i32
    %c0_i32_1 = arith.constant 0 : i32
    return %c0_i32, %c0_i32_0 : i32, i32
  }
  func.func @transform_2(%arg0: i32) -> (i32, i32) {
    %c0_i32 = arith.constant 0 : i32
    %c0_i32_0 = arith.constant 0 : i32
    return %arg0, %c0_i32 : i32, i32
  }
  func.func @transform_3(%arg0: i32) -> (i32, i32) {
    %c0_i32 = arith.constant 0 : i32
    %c0_i32_0 = arith.constant 0 : i32
    return %c0_i32, %arg0 : i32, i32
  }
}

</mosaic_0001>

<llo_original>
// kernel: protonet_forward.3
$region0: #{protonet_forward.3}
  #allocation0 [shape = 'u32[]', space=smem, size = 0x4, offset = 0x4, fixed_abs, tag = 'smem constant byte address 0x4 - core index']
  #allocation1 [shape = 'u32[144,128]{1,0:T(1,128)}', space=vmem, size = 0x12000, scoped, tag = 'internal scratch']
  %s0 = inlined_call_operand.vmem [shape: f32[8,32], index: 0, kind: input, shape index: {}]
  %s1 = inlined_call_operand.vmem [shape: f32[8,1], index: 1, kind: input, shape index: {}]
  %s2 = inlined_call_operand.vmem [shape: f32[8,32], index: 2, kind: input, shape index: {}]
  %s3 = inlined_call_operand.vmem [shape: f32[8,8], index: 3, kind: output, shape index: {}]
  %s4 = sld [smem:[#allocation0]]
  $region22: #{protonet_forward.3} parent=0
    _
  %s6 = ssub.s32 1, %s4
  %s7 = scalar_select 0, %s6, %s4
  // Predicated region
  $region2: #{protonet_forward.3} parent=0 // pred_check
    _
  $region3: #{protonet_forward.3} parent=0 // pred_check_branch
    %9 = sbr.rel (0) target = $region5
  $region4: #{protonet_forward.3} parent=0 // pred_region
    _
  $region5: #{protonet_forward.3} parent=0 // pred_fallthru
    _
  // Predicated region
  $region6: #{protonet_forward.3} parent=0 // pred_check
    _
  $region7: #{protonet_forward.3} parent=0 // pred_check_branch
    %11 = sbr.rel (0) target = $region9
  $region8: #{protonet_forward.3} parent=0 // pred_region
    _
  $region9: #{protonet_forward.3} parent=0 // pred_fallthru
    _
  // Predicated region
  $region10: #{protonet_forward.3} parent=0 // pred_check
    _
  $region11: #{protonet_forward.3} parent=0 // pred_check_branch
    %13 = sbr.rel (0) target = $region13
  $region12: #{protonet_forward.3} parent=0 // pred_region
    _
  $region13: #{protonet_forward.3} parent=0 // pred_fallthru
    _
  %v14 = vld [vmem:[%s2] sm:$0xff]
  %v15 = vld [vmem:[%s0] sm:$0xff]
  %vm16 = vcmask 261120
  %v18 = vsel %vm16, %v15, 0
  %v21 = vsel %vm16, %v14, 0
  %23 = vmatprep.subr.mxu0 0.0
  %24 = vmatpush1.xpose.msra.mxu0 %v21
  %25 = vmatprep.subr.mxu0 0.0
  %26 = vmatpush1.xpose.msra.mxu0 0.0
  %27 = vmatprep.subr.mxu0 0.0
  %28 = vmatpush1.xpose.msra.mxu0 0.0
  %29 = vmatprep.subr.mxu0 0.0
  %30 = vmatpush1.xpose.msra.mxu0 0.0
  %31 = vmatprep.subr.mxu0 0.0
  %32 = vmatpush1.xpose.msra.mxu0 0.0
  %33 = vmatprep.subr.mxu0 0.0
  %34 = vmatpush1.xpose.msra.mxu0 0.0
  %35 = vmatprep.subr.mxu0 0.0
  %36 = vmatpush1.xpose.msra.mxu0 0.0
  %37 = vmatprep.subr.mxu0 0.0
  %38 = vmatpush1.xpose.msra.mxu0 0.0
  %39 = vmatprep.subr.mxu0 0.0
  %40 = vmatpush1.xpose.msra.mxu0 0.0
  %41 = vmatprep.subr.mxu0 0.0
  %42 = vmatpush1.xpose.msra.mxu0 0.0
  %43 = vmatprep.subr.mxu0 0.0
  %44 = vmatpush1.xpose.msra.mxu0 0.0
  %45 = vmatprep.subr.mxu0 0.0
  %46 = vmatpush1.xpose.msra.mxu0 0.0
  %47 = vmatprep.subr.mxu0 0.0
  %48 = vmatpush1.xpose.msra.mxu0 0.0
  %49 = vmatprep.subr.mxu0 0.0
  %50 = vmatpush1.xpose.msra.mxu0 0.0
  %51 = vmatprep.subr.mxu0 0.0
  %52 = vmatpush1.xpose.msra.mxu0 0.0
  %53 = vmatprep.subr.mxu0 0.0
  %54 = vmatpush1.xpose.msra.mxu0 0.0
  %55 = vmatprep.subr.mxu0 0.0
  %56 = vmatpush1.xpose.msra.mxu0 0.0
  %57 = vmatprep.subr.mxu0 0.0
  %58 = vmatpush1.xpose.msra.mxu0 0.0
  %59 = vmatprep.subr.mxu0 0.0
  %60 = vmatpush1.xpose.msra.mxu0 0.0
  %61 = vmatprep.subr.mxu0 0.0
  %62 = vmatpush1.xpose.msra.mxu0 0.0
  %63 = vmatprep.subr.mxu0 0.0
  %64 = vmatpush1.xpose.msra.mxu0 0.0
  %65 = vmatprep.subr.mxu0 0.0
  %66 = vmatpush1.xpose.msra.mxu0 0.0
  %67 = vmatprep.subr.mxu0 0.0
  %68 = vmatpush1.xpose.msra.mxu0 0.0
  %69 = vmatprep.subr.mxu0 0.0
  %70 = vmatpush1.xpose.msra.mxu0 0.0
  %71 = vmatprep.subr.mxu0 0.0
  %72 = vmatpush1.xpose.msra.mxu0 0.0
  %73 = vmatprep.subr.mxu0 0.0
  %74 = vmatpush1.xpose.msra.mxu0 0.0
  %75 = vmatprep.subr.mxu0 0.0
  %76 = vmatpush1.xpose.msra.mxu0 0.0
  %77 = vmatprep.subr.mxu0 0.0
  %78 = vmatpush1.xpose.msra.mxu0 0.0
  %79 = vmatprep.subr.mxu0 0.0
  %80 = vmatpush1.xpose.msra.mxu0 0.0
  %81 = vmatprep.subr.mxu0 0.0
  %82 = vmatpush1.xpose.msra.mxu0 0.0
  %83 = vmatprep.subr.mxu0 0.0
  %84 = vmatpush1.xpose.msra.mxu0 0.0
  %85 = vmatprep.subr.mxu0 0.0
  %86 = vmatpush1.xpose.msra.mxu0 0.0
  %87 = vmatprep.mubr.f32.mxu0 0.0
  %88 = vmatmul.mubr.f32.gmra.mrb[0].mxu0 %v18
  %v89 = vpop.f32.mrb[0].mxu0
  %v90 = vadd.f32 0.0, %v89
  %v91 = vpop.f32.mrb[0].mxu0
  %92 = vdwg.mxu0
  %v93 = vmul.f32 %v14, %v14
  %v95 = vsel %vm16, 1.0, 0
  %v98 = vsel %vm16, %v93, 0
  %100 = vmatprep.subr.mxu0 0.0
  %101 = vmatpush1.xpose.msra.mxu0 %v98
  %102 = vmatprep.subr.mxu0 0.0
  %103 = vmatpush1.xpose.msra.mxu0 0.0
  %104 = vmatprep.subr.mxu0 0.0
  %105 = vmatpush1.xpose.msra.mxu0 0.0
  %106 = vmatprep.subr.mxu0 0.0
  %107 = vmatpush1.xpose.msra.mxu0 0.0
  %108 = vmatprep.subr.mxu0 0.0
  %109 = vmatpush1.xpose.msra.mxu0 0.0
  %110 = vmatprep.subr.mxu0 0.0
  %111 = vmatpush1.xpose.msra.mxu0 0.0
  %112 = vmatprep.subr.mxu0 0.0
  %113 = vmatpush1.xpose.msra.mxu0 0.0
  %114 = vmatprep.subr.mxu0 0.0
  %115 = vmatpush1.xpose.msra.mxu0 0.0
  %116 = vmatprep.subr.mxu0 0.0
  %117 = vmatpush1.xpose.msra.mxu0 0.0
  %118 = vmatprep.subr.mxu0 0.0
  %119 = vmatpush1.xpose.msra.mxu0 0.0
  %120 = vmatprep.subr.mxu0 0.0
  %121 = vmatpush1.xpose.msra.mxu0 0.0
  %122 = vmatprep.subr.mxu0 0.0
  %123 = vmatpush1.xpose.msra.mxu0 0.0
  %124 = vmatprep.subr.mxu0 0.0
  %125 = vmatpush1.xpose.msra.mxu0 0.0
  %126 = vmatprep.subr.mxu0 0.0
  %127 = vmatpush1.xpose.msra.mxu0 0.0
  %128 = vmatprep.subr.mxu0 0.0
  %129 = vmatpush1.xpose.msra.mxu0 0.0
  %130 = vmatprep.subr.mxu0 0.0
  %131 = vmatpush1.xpose.msra.mxu0 0.0
  %132 = vmatprep.subr.mxu0 0.0
  %133 = vmatpush1.xpose.msra.mxu0 0.0
  %134 = vmatprep.subr.mxu0 0.0
  %135 = vmatpush1.xpose.msra.mxu0 0.0
  %136 = vmatprep.subr.mxu0 0.0
  %137 = vmatpush1.xpose.msra.mxu0 0.0
  %138 = vmatprep.subr.mxu0 0.0
  %139 = vmatpush1.xpose.msra.mxu0 0.0
  %140 = vmatprep.subr.mxu0 0.0
  %141 = vmatpush1.xpose.msra.mxu0 0.0
  %142 = vmatprep.subr.mxu0 0.0
  %143 = vmatpush1.xpose.msra.mxu0 0.0
  %144 = vmatprep.subr.mxu0 0.0
  %145 = vmatpush1.xpose.msra.mxu0 0.0
  %146 = vmatprep.subr.mxu0 0.0
  %147 = vmatpush1.xpose.msra.mxu0 0.0
  %148 = vmatprep.subr.mxu0 0.0
  %149 = vmatpush1.xpose.msra.mxu0 0.0
  %150 = vmatprep.subr.mxu0 0.0
  %151 = vmatpush1.xpose.msra.mxu0 0.0
  %152 = vmatprep.subr.mxu0 0.0
  %153 = vmatpush1.xpose.msra.mxu0 0.0
  %154 = vmatprep.subr.mxu0 0.0
  %155 = vmatpush1.xpose.msra.mxu0 0.0
  %156 = vmatprep.subr.mxu0 0.0
  %157 = vmatpush1.xpose.msra.mxu0 0.0
  %158 = vmatprep.subr.mxu0 0.0
  %159 = vmatpush1.xpose.msra.mxu0 0.0
  %160 = vmatprep.subr.mxu0 0.0
  %161 = vmatpush1.xpose.msra.mxu0 0.0
  %162 = vmatprep.subr.mxu0 0.0
  %163 = vmatpush1.xpose.msra.mxu0 0.0
  %164 = vmatprep.mubr.f32.mxu0 0.0
  %165 = vmatmul.mubr.f32.gmra.mrb[0].mxu0 %v95
  %v166 = vpop.f32.mrb[0].mxu0
  %v167 = vadd.f32 0.0, %v166
  %v168 = vpop.f32.mrb[0].mxu0
  %169 = vdwg.mxu0
  %v170 = vmul.f32 %v90, 2.0
  %v171 = vld [vmem:[%s1] sm:$0xff]
  %173 = vset.pattern.permute.xlu0 0
  %174 = vperm.xlu0 %173, %v171
  %v175 = vpop.permute.xlu0 %174
  %v177 = vsub.f32 %v170, %v175
  %v178 = vlaneseq
  %v179 = vshrl.u32 %v178, 7
  %v180 = vsub.s32 0, %v179
  %v181 = vrot.slane %v167, %v180
  %v182 = vsub.f32 %v177, %v181
  %v183 = vmin.f32 %v182, 0.0
  %vm184 = vcmask 64512
  %185 = vst.msk [vmem:[%s3] sm:$0xff] %vm184, %v183
  // Predicated region
  $region14: #{protonet_forward.3} parent=0 // pred_check
    _
  $region15: #{protonet_forward.3} parent=0 // pred_check_branch
    %187 = sbr.rel (0) target = $region17
  $region16: #{protonet_forward.3} parent=0 // pred_region
    _
  $region17: #{protonet_forward.3} parent=0 // pred_fallthru
    _
  // Predicated region
  $region18: #{protonet_forward.3} parent=0 // pred_check
    _
  $region19: #{protonet_forward.3} parent=0 // pred_check_branch
    %189 = sbr.rel (0) target = $region21
  $region20: #{protonet_forward.3} parent=0 // pred_region
    _
  $region21: #{protonet_forward.3} parent=0 // pred_fallthru
    _

// kernel: protonet_forward.2
$region0: #{protonet_forward.2}
  #allocation0 [shape = 'u32[]', space=smem, size = 0x4, offset = 0x4, fixed_abs, tag = 'smem constant byte address 0x4 - core index']
  #allocation1 [shape = 'u32[144,128]{1,0:T(1,128)}', space=vmem, size = 0x12000, scoped, tag = 'internal scratch']
  #allocation2 [shape = 'f32[8,32]{1,0:T(8,128)}', space=vmem, size = 0x1000, scoped, tag = 'scratch operand']
  %s0 = inlined_call_operand.vmem [shape: f32[8,32], index: 0, kind: input, shape index: {}]
  %s1 = inlined_call_operand.vmem [shape: f32[8,32], index: 1, kind: output, shape index: {0}]
  %s2 = inlined_call_operand.vmem [shape: f32[8,1], index: 2, kind: output, shape index: {1}]
  %3 = xla_tuple %s1, %s2
  %s4 = sld [smem:[#allocation0]]
  $region30: #{protonet_forward.2} parent=0
    _
  %s6 = ssub.s32 1, %s4
  %s7 = scalar_select 0, %s6, %s4
  // Predicated region
  $region2: #{protonet_forward.2} parent=0 // pred_check
    _
  $region3: #{protonet_forward.2} parent=0 // pred_check_branch
    %9 = sbr.rel (0) target = $region5
  $region4: #{protonet_forward.2} parent=0 // pred_region
    _
  $region5: #{protonet_forward.2} parent=0 // pred_fallthru
    _
  %p10 = scmp.eq.s32.totalorder 0, 0
  // Predicated region
  $region6: #{protonet_forward.2} parent=0 // pred_check
    %p11 = pneg %p10
  $region7: #{protonet_forward.2} parent=0 // pred_check_branch
    %13 = sbr.rel (%p11) target = $region9
  $region8: #{protonet_forward.2} parent=0 // pred_region
    %vm14 = vcmask 261120
    %15 = vst.msk [vmem:[#allocation2] sm:$0xff] %vm14, 0.0
  $region9: #{protonet_forward.2} parent=0 // pred_fallthru
    _
  %v16 = vlaneseq
  %v17 = vshrl.u32 %v16, 7
  %v18 = vlaneseq
  %v19 = vand.u32 %v18, 127
  %s20 = smul.u32 0, 8
  %v21 = vstv %s20
  %v22 = vadd.s32 %v19, %v21
  %v23 = vmul.u32 %v17, 2
  %vm24 = vcmp.ge.s32.totalorder %v22, %v23
  %v25 = vadd.s32 %v17, 1
  %v26 = vmul.u32 %v25, 2
  %vm27 = vcmp.lt.s32.totalorder %v22, %v26
  %vm28 = vmand %vm24, %vm27
  %vm29 = vcmp.lt.s32.totalorder %v22, 8
  %vm30 = vmand %vm28, %vm29
  %v31 = vsel %vm30, 1.0, 0.0
  %v32 = vld [vmem:[#allocation2] sm:$0xff]
  %v33 = vld [vmem:[%s0] sm:$0xff]
  %vm34 = vcmask 64512
  %v36 = vsel %vm34, %v31, 0
  %38 = vmatprep.subr.mxu0 0.0
  %39 = vmatpush1.msra.mxu0 %v33
  %40 = vmatprep.subr.mxu0 0.0
  %41 = vmatpush1.msra.mxu0 0.0
  %42 = vmatprep.subr.mxu0 0.0
  %43 = vmatpush1.msra.mxu0 0.0
  %44 = vmatprep.subr.mxu0 0.0
  %45 = vmatpush1.msra.mxu0 0.0
  %46 = vmatprep.subr.mxu0 0.0
  %47 = vmatpush1.msra.mxu0 0.0
  %48 = vmatprep.subr.mxu0 0.0
  %49 = vmatpush1.msra.mxu0 0.0
  %50 = vmatprep.subr.mxu0 0.0
  %51 = vmatpush1.msra.mxu0 0.0
  %52 = vmatprep.subr.mxu0 0.0
  %53 = vmatpush1.msra.mxu0 0.0
  %54 = vmatprep.subr.mxu0 0.0
  %55 = vmatpush1.msra.mxu0 0.0
  %56 = vmatprep.subr.mxu0 0.0
  %57 = vmatpush1.msra.mxu0 0.0
  %58 = vmatprep.subr.mxu0 0.0
  %59 = vmatpush1.msra.mxu0 0.0
  %60 = vmatprep.subr.mxu0 0.0
  %61 = vmatpush1.msra.mxu0 0.0
  %62 = vmatprep.subr.mxu0 0.0
  %63 = vmatpush1.msra.mxu0 0.0
  %64 = vmatprep.subr.mxu0 0.0
  %65 = vmatpush1.msra.mxu0 0.0
  %66 = vmatprep.subr.mxu0 0.0
  %67 = vmatpush1.msra.mxu0 0.0
  %68 = vmatprep.subr.mxu0 0.0
  %69 = vmatpush1.msra.mxu0 0.0
  %70 = vmatprep.subr.mxu0 0.0
  %71 = vmatpush1.msra.mxu0 0.0
  %72 = vmatprep.subr.mxu0 0.0
  %73 = vmatpush1.msra.mxu0 0.0
  %74 = vmatprep.subr.mxu0 0.0
  %75 = vmatpush1.msra.mxu0 0.0
  %76 = vmatprep.subr.mxu0 0.0
  %77 = vmatpush1.msra.mxu0 0.0
  %78 = vmatprep.subr.mxu0 0.0
  %79 = vmatpush1.msra.mxu0 0.0
  %80 = vmatprep.subr.mxu0 0.0
  %81 = vmatpush1.msra.mxu0 0.0
  %82 = vmatprep.subr.mxu0 0.0
  %83 = vmatpush1.msra.mxu0 0.0
  %84 = vmatprep.subr.mxu0 0.0
  %85 = vmatpush1.msra.mxu0 0.0
  %86 = vmatprep.subr.mxu0 0.0
  %87 = vmatpush1.msra.mxu0 0.0
  %88 = vmatprep.subr.mxu0 0.0
  %89 = vmatpush1.msra.mxu0 0.0
  %90 = vmatprep.subr.mxu0 0.0
  %91 = vmatpush1.msra.mxu0 0.0
  %92 = vmatprep.subr.mxu0 0.0
  %93 = vmatpush1.msra.mxu0 0.0
  %94 = vmatprep.subr.mxu0 0.0
  %95 = vmatpush1.msra.mxu0 0.0
  %96 = vmatprep.subr.mxu0 0.0
  %97 = vmatpush1.msra.mxu0 0.0
  %98 = vmatprep.subr.mxu0 0.0
  %99 = vmatpush1.msra.mxu0 0.0
  %100 = vmatprep.subr.mxu0 0.0
  %101 = vmatpush1.msra.mxu0 0.0
  %102 = vmatprep.mubr.f32.mxu0 0.0
  %103 = vmatmul.mubr.f32.gmra.mrb[0].mxu0 %v36
  %v104 = vpop.f32.mrb[0].mxu0
  %v105 = vadd.f32 0.0, %v104
  %v106 = vpop.f32.mrb[0].mxu0
  %107 = vdwg.mxu0
  %v108 = vadd.f32 %v32, %v105
  %vm109 = vcmask 261120
  %110 = vst.msk [vmem:[#allocation2] sm:$0xff] %vm109, %v108
  // Predicated region
  $region10: #{protonet_forward.2} parent=0 // pred_check
    %p111 = pneg %p10
  $region11: #{protonet_forward.2} parent=0 // pred_check_branch
    %113 = sbr.rel (%p111) target = $region13
  $region12: #{protonet_forward.2} parent=0 // pred_region
    %v114 = vld [vmem:[#allocation2] sm:$0xff]
    %v115 = vmul.f32 %v114, 0.5
    %116 = vst.msk [vmem:[%s1] sm:$0xff] %vm109, %v115
    %v117 = vmul.f32 %v115, %v115
    %v118 = vsel %vm109, %v117, 0.0
    %119 = vadd.xlane.f32.xlu0 %v118
    %v120 = vpop.xlane.xlu0 %119
    %vm121 = vcmask 7168
    %122 = vst.msk [vmem:[%s2] sm:$0xff] %vm121, %v120
  $region13: #{protonet_forward.2} parent=0 // pred_fallthru
    _
  // Predicated region
  $region14: #{protonet_forward.2} parent=0 // pred_check
    _
  $region15: #{protonet_forward.2} parent=0 // pred_check_branch
    %124 = sbr.rel (0) target = $region17
  $region16: #{protonet_forward.2} parent=0 // pred_region
    _
  $region17: #{protonet_forward.2} parent=0 // pred_fallthru
    _
  // Predicated region
  $region18: #{protonet_forward.2} parent=0 // pred_check
    _
  $region19: #{protonet_forward.2} parent=0 // pred_check_branch
    %126 = sbr.rel (0) target = $region21
  $region20: #{protonet_forward.2} parent=0 // pred_region
    _
  $region21: #{protonet_forward.2} parent=0 // pred_fallthru
    _
  // Predicated region
  $region22: #{protonet_forward.2} parent=0 // pred_check
    _
  $region23: #{protonet_forward.2} parent=0 // pred_check_branch
    %128 = sbr.rel (0) target = $region25
  $region24: #{protonet_forward.2} parent=0 // pred_region
    _
  $region25: #{protonet_forward.2} parent=0 // pred_fallthru
    _
  // Predicated region
  $region26: #{protonet_forward.2} parent=0 // pred_check
    _
  $region27: #{protonet_forward.2} parent=0 // pred_check_branch
    %130 = sbr.rel (0) target = $region29
  $region28: #{protonet_forward.2} parent=0 // pred_region
    _
  $region29: #{protonet_forward.2} parent=0 // pred_fallthru
    _

</llo_original>
